<compile_context>
chip_gen: v6e
topology: v6e:2x2x1
jax: 0.10.0
libtpu: 0.0.40
codegen_flags: <defaults>
</compile_context>

<pallas_src>
import jax
import jax.numpy as jnp
from jax import lax
from jax.experimental import pallas as pl
from jax.experimental.pallas import tpu as pltpu


def _round_up(x, m):
    return ((x + m - 1) // m) * m


def _cdiv(a, b):
    return -(-a // b)


def _vmem_capacity_bytes():
    """Physical VMEM per core; conservative 64 MiB (v7x) if the query fails
    (e.g. when running under the CPU interpreter)."""
    try:
        info = pltpu.get_tpu_info()
        cap = int(getattr(info, "vmem_capacity_bytes", 0) or 0)
        if cap > 0:
            return cap
    except Exception:
        pass
    return 64 * 1024 * 1024


def _make_dice_kernel(HW, TR, TK, need_lane_mask):
    """grid = (row_blocks, k_blocks), reduction (k) axis last."""
    n_chunks = TK // 128

    def kernel(p_ref, t_ref, o_ref, num_acc, den_acc):
        # Grid queries only at the kernel's top level (interpret-mode safe).
        k = pl.program_id(1)
        nk = pl.num_programs(1)

        @pl.when(k == 0)
        def _init():
            num_acc[...] = jnp.zeros_like(num_acc)
            den_acc[...] = jnp.zeros_like(den_acc)

        if need_lane_mask:
            lane = lax.broadcasted_iota(jnp.int32, (TR, 128), 1)  # hoisted
            block_start = k * TK

        # Hot loop: lane-aligned 128-wide slices, pure VPU work into
        # lane-dense accumulators (no XLU, no masked sublane stores).
        for j in range(n_chunks):
            sl = slice(j * 128, (j + 1) * 128)
            p = p_ref[:, sl].astype(jnp.float32)
            t = t_ref[:, sl].astype(jnp.float32)
            if need_lane_mask:
                valid = lane < (HW - block_start - j * 128)
                p = jnp.where(valid, p, 0.0)
                t = jnp.where(valid, t, 0.0)
            num_acc[...] += p * t
            den_acc[...] += p * p + t * t

        @pl.when(k == nk - 1)
        def _finalize():
            num_row = jnp.sum(num_acc[...], axis=-1, keepdims=True)  # (TR, 1)
            den_row = jnp.sum(den_acc[...], axis=-1, keepdims=True)  # (TR, 1)
            dice = 2.0 * num_row / den_row        # no eps, matches reference
            # Lane-dense (unmasked) output stores; wrapper reads lane 0.
            o_ref[...] = jnp.broadcast_to(dice, (TR, 128)).astype(jnp.float32)

    return kernel


def dice_loss(inputs, targets, *, row_tile=None, lane_tile=None):
    """inputs, targets: (B, C, H, W) arrays of identical shape (f32 or bf16)."""
    assert inputs.shape == targets.shape, "Input sizes must be equal."
    assert inputs.ndim == 4, "Input must be a 4D Tensor."
    B, C, H, W = inputs.shape
    BC, HW = B * C, H * W

    p2 = inputs.reshape(BC, HW)
    t2 = targets.reshape(BC, HW)

    itemsize = jnp.dtype(inputs.dtype).itemsize
    vmem_cap = _vmem_capacity_bytes()
    big_vmem = vmem_cap >= (96 << 20)      # v5e/v6e: 128 MiB; v7x: 64 MiB

    if row_tile is None:
        row_tile = 256
    if lane_tile is None:
        # dtype-aware lane tile: keep each per-step, per-input DMA at ~4 MiB
        # (8 MiB on 128 MiB-VMEM parts) whether inputs are f32 or bf16.
        tile_bytes_target = (8 << 20) if big_vmem else (4 << 20)
        lane_tile = max(128, (tile_bytes_target // (row_tile * itemsize)) // 128 * 128)

    TR = min(row_tile, _round_up(BC, 8))
    if BC > 8:
        # Guarantee >= 2 blocks on the "parallel" row axis so both v7x
        # TensorCores get work (no effect on single-TC v5e/v6e).
        TR = min(TR, max(8, _round_up((BC + 1) // 2, 8)))
    TK = min(lane_tile, _round_up(HW, 128))

    # VMEM budget: 2 inputs x 2 pipeline buffers + output double buffer +
    # two f32 accumulators + headroom.  Keep well inside physical VMEM.
    def vmem_estimate(tk):
        inputs_b = 2 * 2 * TR * tk * itemsize
        out_b = 2 * TR * 128 * 4
        acc_b = 2 * TR * 128 * 4
        return inputs_b + out_b + acc_b + (2 << 20)

    while vmem_estimate(TK) > int(0.7 * vmem_cap) and TK >= 512:
        TK //= 2

    grid_r = _cdiv(BC, TR)
    grid_k = _cdiv(HW, TK)
    need_lane_mask = (HW % TK) != 0

    # Explicit limit (>= 16 MiB so v5e double-buffers past its scoped default),
    # capped at 75% of physical VMEM (matters on v7x's 64 MiB).
    vmem_limit = int(min(max(vmem_estimate(TK), 16 << 20), (vmem_cap * 3) // 4))

    cost = pl.CostEstimate(
        flops=5 * BC * HW,                # p*t, p*p, t*t + two accumulate adds
        transcendentals=0,
        bytes_accessed=2 * BC * HW * itemsize + grid_r * TR * 128 * 4,
    )

    out = pl.pallas_call(
        _make_dice_kernel(HW, TR, TK, need_lane_mask),
        out_shape=jax.ShapeDtypeStruct((grid_r * TR, 128), jnp.float32),
        grid_spec=pltpu.PrefetchScalarGridSpec(
            num_scalar_prefetch=0,
            grid=(grid_r, grid_k),
            in_specs=[
                pl.BlockSpec((TR, TK), lambda i, k: (i, k)),
                pl.BlockSpec((TR, TK), lambda i, k: (i, k)),
            ],
            out_specs=pl.BlockSpec((TR, 128), lambda i, k: (i, 0)),
            scratch_shapes=[
                pltpu.VMEM((TR, 128), jnp.float32),   # per-row per-lane num partials
                pltpu.VMEM((TR, 128), jnp.float32),   # per-row per-lane den1+den2 partials
            ],
        ),
        compiler_params=pltpu.CompilerParams(
            dimension_semantics=("parallel", "arbitrary"),
            vmem_limit_bytes=vmem_limit,
        ),
        cost_estimate=cost,
    )(p2, t2)

    # Per-(batch, class) dice; drop block-padded rows and class 0, then the
    # trivial O(B*C) finish runs in plain XLA.
    dice = out[:BC, 0].reshape(B, C)
    dice_eso = dice[:, 1:]
    return -1.0 * jnp.sum(dice_eso) / B


def dice_loss_ref(inputs, targets):
    probs = inputs.astype(jnp.float32)
    tgt = targets.astype(jnp.float32)
    num = jnp.sum(probs * tgt, axis=(2, 3))
    den1 = jnp.sum(probs * probs, axis=(2, 3))
    den2 = jnp.sum(tgt * tgt, axis=(2, 3))
    dice = 2.0 * (num / (den1 + den2))
    dice_eso = dice[:, 1:]
    return -1.0 * jnp.sum(dice_eso) / dice_eso.shape[0]


def _make_case(key, B, C, H, W):
    k1, k2 = jax.random.split(key)
    logits = jax.random.normal(k1, (B, C, H, W), dtype=jnp.float32)
    probs = jax.nn.softmax(logits, axis=1)
    labels = jax.random.randint(k2, (B, H, W), 0, C)
    targets = jnp.transpose(jax.nn.one_hot(labels, C, dtype=jnp.float32),
                            (0, 3, 1, 2))
    return probs, targets


if __name__ == "__main__":
    key = jax.random.PRNGKey(0)
    k_a, k_b = jax.random.split(key)

    # Main case: B=2, C=4, H=W=16.
    probs, targets = _make_case(k_a, 2, 4, 16, 16)
    loss = jax.block_until_ready(dice_loss(probs, targets))
    ref = dice_loss_ref(probs, targets)
    assert jnp.allclose(loss, ref, rtol=1e-5, atol=1e-5), (loss, ref)

    # Unaligned case: exercises lane-tail masking and padded-row dropping.
    probs2, targets2 = _make_case(k_b, 2, 3, 10, 12)
    loss2 = jax.block_until_ready(dice_loss(probs2, targets2))
    ref2 = dice_loss_ref(probs2, targets2)
    assert jnp.allclose(loss2, ref2, rtol=1e-5, atol=1e-5), (loss2, ref2)

    print("KERNEL_OK")
</pallas_src>

<mosaic_0001>
module attributes {stable_mosaic.version = 11 : i64} {
  func.func @kernel(%arg0: i32, %arg1: i32, %arg2: memref<8x256xf32, #tpu.memory_space<vmem>>, %arg3: memref<8x256xf32, #tpu.memory_space<vmem>>, %arg4: memref<8x128xf32, #tpu.memory_space<vmem>>, %arg5: memref<8x128xf32, #tpu.memory_space<vmem>>, %arg6: memref<8x128xf32, #tpu.memory_space<vmem>>) attributes {dimension_semantics = [#tpu.dimension_semantics<parallel>, #tpu.dimension_semantics<arbitrary>], iteration_bounds = array<i64: 1, 1>, scalar_prefetch = 0 : i64, scratch_operands = 2 : i64, tpu.core_type = #tpu.core_type<tc>, window_params = [{transform_indices = @transform_0, window_bounds = array<i64: 8, 256>}, {transform_indices = @transform_1, window_bounds = array<i64: 8, 256>}, {transform_indices = @transform_2, window_bounds = array<i64: 8, 128>}]} {
    %c0_i32 = arith.constant 0 : i32
    %0 = arith.cmpi eq, %arg1, %c0_i32 : i32
    %1 = arith.extui %0 : i1 to i32
    %c0_i32_0 = arith.constant 0 : i32
    %2 = arith.cmpi ne, %1, %c0_i32_0 : i32
    scf.if %2 {
      %cst = arith.constant 0.000000e+00 : f32
      %30 = vector.broadcast %cst : f32 to vector<8x128xf32>
      %c0_25 = arith.constant 0 : index
      %c0_26 = arith.constant 0 : index
      %31 = vector.load %arg5[%c0_25, %c0_26] : memref<8x128xf32, #tpu.memory_space<vmem>>, vector<8x128xf32>
      tpu.vector_store %arg5[%c0_25, %c0_26], %30 {strides = array<i32>} : memref<8x128xf32, #tpu.memory_space<vmem>>, vector<8x128xf32>,
      %cst_27 = arith.constant 0.000000e+00 : f32
      %32 = vector.broadcast %cst_27 : f32 to vector<8x128xf32>
      %c0_28 = arith.constant 0 : index
      %c0_29 = arith.constant 0 : index
      %33 = vector.load %arg6[%c0_28, %c0_29] : memref<8x128xf32, #tpu.memory_space<vmem>>, vector<8x128xf32>
      tpu.vector_store %arg6[%c0_28, %c0_29], %32 {strides = array<i32>} : memref<8x128xf32, #tpu.memory_space<vmem>>, vector<8x128xf32>,
    } else {
    }
    %c0 = arith.constant 0 : index
    %c0_1 = arith.constant 0 : index
    %3 = vector.load %arg2[%c0, %c0_1] : memref<8x256xf32, #tpu.memory_space<vmem>>, vector<8x128xf32>
    %c0_2 = arith.constant 0 : index
    %c0_3 = arith.constant 0 : index
    %4 = vector.load %arg3[%c0_2, %c0_3] : memref<8x256xf32, #tpu.memory_space<vmem>>, vector<8x128xf32>
    %c0_4 = arith.constant 0 : index
    %c0_5 = arith.constant 0 : index
    %5 = vector.load %arg5[%c0_4, %c0_5] : memref<8x128xf32, #tpu.memory_space<vmem>>, vector<8x128xf32>
    %6 = arith.mulf %3, %4 : vector<8x128xf32>
    %7 = arith.addf %5, %6 : vector<8x128xf32>
    %c0_6 = arith.constant 0 : index
    %c0_7 = arith.constant 0 : index
    %8 = vector.load %arg5[%c0_6, %c0_7] : memref<8x128xf32, #tpu.memory_space<vmem>>, vector<8x128xf32>
    tpu.vector_store %arg5[%c0_6, %c0_7], %7 {strides = array<i32>} : memref<8x128xf32, #tpu.memory_space<vmem>>, vector<8x128xf32>,
    %c0_8 = arith.constant 0 : index
    %c0_9 = arith.constant 0 : index
    %9 = vector.load %arg6[%c0_8, %c0_9] : memref<8x128xf32, #tpu.memory_space<vmem>>, vector<8x128xf32>
    %10 = arith.mulf %3, %3 : vector<8x128xf32>
    %11 = arith.mulf %4, %4 : vector<8x128xf32>
    %12 = arith.addf %10, %11 : vector<8x128xf32>
    %13 = arith.addf %9, %12 : vector<8x128xf32>
    %c0_10 = arith.constant 0 : index
    %c0_11 = arith.constant 0 : index
    %14 = vector.load %arg6[%c0_10, %c0_11] : memref<8x128xf32, #tpu.memory_space<vmem>>, vector<8x128xf32>
    tpu.vector_store %arg6[%c0_10, %c0_11], %13 {strides = array<i32>} : memref<8x128xf32, #tpu.memory_space<vmem>>, vector<8x128xf32>,
    %c0_12 = arith.constant 0 : index
    %c128 = arith.constant 128 : index
    %15 = vector.load %arg2[%c0_12, %c128] : memref<8x256xf32, #tpu.memory_space<vmem>>, vector<8x128xf32>
    %c0_13 = arith.constant 0 : index
    %c128_14 = arith.constant 128 : index
    %16 = vector.load %arg3[%c0_13, %c128_14] : memref<8x256xf32, #tpu.memory_space<vmem>>, vector<8x128xf32>
    %c0_15 = arith.constant 0 : index
    %c0_16 = arith.constant 0 : index
    %17 = vector.load %arg5[%c0_15, %c0_16] : memref<8x128xf32, #tpu.memory_space<vmem>>, vector<8x128xf32>
    %18 = arith.mulf %15, %16 : vector<8x128xf32>
    %19 = arith.addf %17, %18 : vector<8x128xf32>
    %c0_17 = arith.constant 0 : index
    %c0_18 = arith.constant 0 : index
    %20 = vector.load %arg5[%c0_17, %c0_18] : memref<8x128xf32, #tpu.memory_space<vmem>>, vector<8x128xf32>
    tpu.vector_store %arg5[%c0_17, %c0_18], %19 {strides = array<i32>} : memref<8x128xf32, #tpu.memory_space<vmem>>, vector<8x128xf32>,
    %c0_19 = arith.constant 0 : index
    %c0_20 = arith.constant 0 : index
    %21 = vector.load %arg6[%c0_19, %c0_20] : memref<8x128xf32, #tpu.memory_space<vmem>>, vector<8x128xf32>
    %22 = arith.mulf %15, %15 : vector<8x128xf32>
    %23 = arith.mulf %16, %16 : vector<8x128xf32>
    %24 = arith.addf %22, %23 : vector<8x128xf32>
    %25 = arith.addf %21, %24 : vector<8x128xf32>
    %c0_21 = arith.constant 0 : index
    %c0_22 = arith.constant 0 : index
    %26 = vector.load %arg6[%c0_21, %c0_22] : memref<8x128xf32, #tpu.memory_space<vmem>>, vector<8x128xf32>
    tpu.vector_store %arg6[%c0_21, %c0_22], %25 {strides = array<i32>} : memref<8x128xf32, #tpu.memory_space<vmem>>, vector<8x128xf32>,
    %c0_i32_23 = arith.constant 0 : i32
    %27 = arith.cmpi eq, %arg1, %c0_i32_23 : i32
    %28 = arith.extui %27 : i1 to i32
    %c0_i32_24 = arith.constant 0 : i32
    %29 = arith.cmpi ne, %28, %c0_i32_24 : i32
    scf.if %29 {
      %c0_25 = arith.constant 0 : index
      %c0_26 = arith.constant 0 : index
      %30 = vector.load %arg5[%c0_25, %c0_26] : memref<8x128xf32, #tpu.memory_space<vmem>>, vector<8x128xf32>
      %cst = arith.constant dense<0.000000e+00> : vector<8xf32>
      %31 = vector.multi_reduction <add>, %30, %cst [1] : vector<8x128xf32> to vector<8xf32>
      %32 = vector.shape_cast %31 : vector<8xf32> to vector<8x1xf32>
      %c0_27 = arith.constant 0 : index
      %c0_28 = arith.constant 0 : index
      %33 = vector.load %arg6[%c0_27, %c0_28] : memref<8x128xf32, #tpu.memory_space<vmem>>, vector<8x128xf32>
      %cst_29 = arith.constant dense<0.000000e+00> : vector<8xf32>
      %34 = vector.multi_reduction <add>, %33, %cst_29 [1] : vector<8x128xf32> to vector<8xf32>
      %35 = vector.shape_cast %34 : vector<8xf32> to vector<8x1xf32>
      %cst_30 = arith.constant 2.000000e+00 : f32
      %36 = vector.broadcast %cst_30 : f32 to vector<8x1xf32>
      %37 = arith.mulf %36, %32 : vector<8x1xf32>
      %38 = arith.divf %37, %35 : vector<8x1xf32>
      %39 = vector.shape_cast %38 : vector<8x1xf32> to vector<8x1xf32>
      %40 = vector.broadcast %39 : vector<8x1xf32> to vector<8x128xf32>
      %c0_31 = arith.constant 0 : index
      %c0_32 = arith.constant 0 : index
      %41 = vector.load %arg4[%c0_31, %c0_32] : memref<8x128xf32, #tpu.memory_space<vmem>>, vector<8x128xf32>
      tpu.vector_store %arg4[%c0_31, %c0_32], %40 {strides = array<i32>} : memref<8x128xf32, #tpu.memory_space<vmem>>, vector<8x128xf32>,
    } else {
    }
    return
  }
  func.func @transform_0(%arg0: i32, %arg1: i32) -> (i32, i32) {
    %c0_i32 = arith.constant 0 : i32
    return %arg0, %arg1 : i32, i32
  }
  func.func @transform_1(%arg0: i32, %arg1: i32) -> (i32, i32) {
    %c0_i32 = arith.constant 0 : i32
    return %arg0, %arg1 : i32, i32
  }
  func.func @transform_2(%arg0: i32, %arg1: i32) -> (i32, i32) {
    %c0_i32 = arith.constant 0 : i32
    %c0_i32_0 = arith.constant 0 : i32
    return %arg0, %c0_i32 : i32, i32
  }
}

</mosaic_0001>

<llo_original>
// kernel: tpu_custom_call.1
$region0: #{tpu_custom_call.1}
  #allocation0 [shape = 'u32[]', space=smem, size = 0x4, offset = 0x4, fixed_abs, tag = 'smem constant byte address 0x4 - core index']
  #allocation1 [shape = 'u32[144,128]{1,0:T(1,128)}', space=vmem, size = 0x12000, scoped, tag = 'internal scratch']
  #allocation2 [shape = 'f32[8,128]{1,0:T(8,128)}', space=vmem, size = 0x1000, scoped, tag = 'scratch operand']
  #allocation3 [shape = 'f32[8,128]{1,0:T(8,128)}', space=vmem, size = 0x1000, scoped, tag = 'scratch operand']
  %s0 = inlined_call_operand.hbm [shape: f32[8,256], index: 0, kind: input, shape index: {}]
  %s1 = inlined_call_operand.hbm [shape: f32[8,256], index: 1, kind: input, shape index: {}]
  %s2 = inlined_call_operand.hbm [shape: f32[8,128], index: 2, kind: output, shape index: {}]
  %s3 = sld [smem:[#allocation0]]
  $region34: #{tpu_custom_call.1} parent=0
    _
  %s5 = ssub.s32 1, %s3
  %s6 = scalar_select 0, %s5, %s3
  $region1: #{tpu_custom_call.1} parent=0
    #allocation4 [shape = 'u8[8192]{0}', space=vmem, size = 0x2000, scoped, tag = 'input window, operand 0, single buffered']
    #allocation5 [shape = 's32[1]{0}', space=sflag, size = 0x4, scoped, tag = 'scoped memory for tpu_custom_call.1']
    #allocation6 [shape = 's32[1]{0}', space=sflag, size = 0x4, scoped, tag = 'scoped memory for tpu_custom_call.1']
    #allocation7 [shape = 'u8[8192]{0}', space=vmem, size = 0x2000, scoped, tag = 'input window, operand 1, single buffered']
    #allocation8 [shape = 's32[1]{0}', space=sflag, size = 0x4, scoped, tag = 'scoped memory for tpu_custom_call.1']
    #allocation9 [shape = 'u8[4096]{0}', space=vmem, size = 0x1000, scoped, tag = 'output window, operand 0, single buffered']
    %7 = vsyncpa [#allocation5], 0
    %8 = vsyncpa [#allocation8], 0
    %9 = vsyncpa [#allocation6], 0
    // Predicated region
    $region2: #{tpu_custom_call.1} parent=1 // pred_check
      _
    $region3: #{tpu_custom_call.1} parent=1 // pred_check_branch
      %11 = sbr.rel (0) target = $region5
    $region4: #{tpu_custom_call.1} parent=1 // pred_region
      %s13 = ssub.s32 256, 256
      %14 = vsyncadd [#allocation5], %s13
      %s16 = sshll.u32 [#allocation4], 4
      %s17 = int_to_ptr.vmem [resolvable:$true] %s16
      %19 = dma.hbm_to_vmem [thread:$0]  %s0, 256, %s17, [#allocation5]
    $region5: #{tpu_custom_call.1} parent=1 // pred_fallthru
      _
    // Predicated region
    $region6: #{tpu_custom_call.1} parent=1 // pred_check
      _
    $region7: #{tpu_custom_call.1} parent=1 // pred_check_branch
      %21 = sbr.rel (0) target = $region9
    $region8: #{tpu_custom_call.1} parent=1 // pred_region
      %s23 = ssub.s32 256, 256
      %24 = vsyncadd [#allocation8], %s23
      %s26 = sshll.u32 [#allocation7], 4
      %s27 = int_to_ptr.vmem [resolvable:$true] %s26
      %29 = dma.hbm_to_vmem [thread:$0]  %s1, 256, %s27, [#allocation8]
    $region9: #{tpu_custom_call.1} parent=1 // pred_fallthru
      _
    // Predicated region
    $region10: #{tpu_custom_call.1} parent=1 // pred_check
      _
    $region11: #{tpu_custom_call.1} parent=1 // pred_check_branch
      %31 = sbr.rel (0) target = $region13
    $region12: #{tpu_custom_call.1} parent=1 // pred_region
      %32 = dma.done [#allocation5], 256
    $region13: #{tpu_custom_call.1} parent=1 // pred_fallthru
      _
    // Predicated region
    $region14: #{tpu_custom_call.1} parent=1 // pred_check
      _
    $region15: #{tpu_custom_call.1} parent=1 // pred_check_branch
      %34 = sbr.rel (0) target = $region17
    $region16: #{tpu_custom_call.1} parent=1 // pred_region
      %35 = dma.done [#allocation8], 256
    $region17: #{tpu_custom_call.1} parent=1 // pred_fallthru
      _
    %p36 = scmp.eq.s32.totalorder 0, 0
    // Predicated region
    $region18: #{tpu_custom_call.1} parent=1 // pred_check
      %p37 = pneg %p36
    $region19: #{tpu_custom_call.1} parent=1 // pred_check_branch
      %39 = sbr.rel (%p37) target = $region21
    $region20: #{tpu_custom_call.1} parent=1 // pred_region
      %40 = vst [vmem:[#allocation2] sm:$0xff] 0.0
      %41 = vst [vmem:[#allocation3] sm:$0xff] 0.0
    $region21: #{tpu_custom_call.1} parent=1 // pred_fallthru
      _
    %v42 = vld [vmem:[#allocation4] sm:$0xff]
    %v43 = vld [vmem:[#allocation7] sm:$0xff]
    %v44 = vld [vmem:[#allocation2] sm:$0xff]
    %v45 = vmul.f32 %v42, %v43
    %v46 = vadd.f32 %v44, %v45
    %47 = vst [vmem:[#allocation2] sm:$0xff] %v46
    %v48 = vld [vmem:[#allocation3] sm:$0xff]
    %v49 = vmul.f32 %v42, %v42
    %v50 = vmul.f32 %v43, %v43
    %v51 = vadd.f32 %v49, %v50
    %v52 = vadd.f32 %v48, %v51
    %53 = vst [vmem:[#allocation3] sm:$0xff] %v52
    %v54 = vld [vmem:[#allocation4 + $0x8] sm:$0xff]
    %v55 = vld [vmem:[#allocation7 + $0x8] sm:$0xff]
    %v56 = vld [vmem:[#allocation2] sm:$0xff]
    %v57 = vmul.f32 %v54, %v55
    %v58 = vadd.f32 %v56, %v57
    %59 = vst [vmem:[#allocation2] sm:$0xff] %v58
    %v60 = vld [vmem:[#allocation3] sm:$0xff]
    %v61 = vmul.f32 %v54, %v54
    %v62 = vmul.f32 %v55, %v55
    %v63 = vadd.f32 %v61, %v62
    %v64 = vadd.f32 %v60, %v63
    %65 = vst [vmem:[#allocation3] sm:$0xff] %v64
    // Predicated region
    $region22: #{tpu_custom_call.1} parent=1 // pred_check
      %p66 = pneg %p36
    $region23: #{tpu_custom_call.1} parent=1 // pred_check_branch
      %68 = sbr.rel (%p66) target = $region25
    $region24: #{tpu_custom_call.1} parent=1 // pred_region
      %v69 = vld [vmem:[#allocation2] sm:$0xff]
      %70 = vadd.xlane.f32.xlu0 %v69
      %v71 = vpop.xlane.xlu0 %70
      %v72 = vld [vmem:[#allocation3] sm:$0xff]
      %73 = vadd.xlane.f32.xlu0 %v72
      %v74 = vpop.xlane.xlu0 %73
      %v75 = vmul.f32 %v71, 2.0
      %v76 = vrcp.pop %v74
      %v77 = vmul.f32 %v75, %v76
      %78 = vst [vmem:[#allocation9] sm:$0xff] %v77
    $region25: #{tpu_custom_call.1} parent=1 // pred_fallthru
      _
    // Predicated region
    $region26: #{tpu_custom_call.1} parent=1 // pred_check
      _
    $region27: #{tpu_custom_call.1} parent=1 // pred_check_branch
      %80 = sbr.rel (0) target = $region29
    $region28: #{tpu_custom_call.1} parent=1 // pred_region
      %s82 = ssub.s32 128, 128
      %83 = vsyncadd [#allocation6], %s82
      %s85 = sshll.u32 [#allocation9], 4
      %s86 = int_to_ptr.vmem [resolvable:$true] %s85
      %88 = dma.vmem_to_hbm [thread:$0]  %s86, 128, %s2, [#allocation6]
    $region29: #{tpu_custom_call.1} parent=1 // pred_fallthru
      _
    // Predicated region
    $region30: #{tpu_custom_call.1} parent=1 // pred_check
      _
    $region31: #{tpu_custom_call.1} parent=1 // pred_check_branch
      %90 = sbr.rel (0) target = $region33
    $region32: #{tpu_custom_call.1} parent=1 // pred_region
      %91 = dma.done [#allocation6], 128
    $region33: #{tpu_custom_call.1} parent=1 // pred_fallthru
      _
    %92 = vsyncpa [#allocation5], 1
    %93 = vsyncpa [#allocation8], 1
    %94 = vsyncpa [#allocation6], 1

</llo_original>
